<compile_context>
chip_gen: v7x
topology: tpu7x:2x2x1
jax: 0.10.0
libtpu: 0.0.40
codegen_flags: <defaults>
</compile_context>

<pallas_src>
import functools

import jax
import jax.numpy as jnp
from jax.experimental import pallas as pl
from jax.experimental.pallas import tpu as pltpu


def _sentinel_kernel(xh_ref, w_ref, b_ref, m_ref, o_ref):
    # One fused GEMM on the MXU, f32 accumulation.
    g = jnp.dot(xh_ref[...], w_ref[...], preferred_element_type=jnp.float32)
    g = jax.nn.sigmoid(g + b_ref[...].astype(jnp.float32))           # EUP + VPU, f32
    s = g * jnp.tanh(m_ref[...].astype(jnp.float32))                 # EUP + VPU, f32
    o_ref[...] = s.astype(o_ref.dtype)


def _round_up(x, m):
    return (x + m - 1) // m * m


@functools.partial(jax.jit, static_argnames=("tile_m", "tile_n", "matmul_dtype"))
def sentinel_forward(x_t, h_last, m_t, w_x, b_x, w_h, b_h,
                     *, tile_m=128, tile_n=256, matmul_dtype=None):
    """
    x_t    : (B, input_size)
    h_last : (B, decoder_dim)
    m_t    : (B, decoder_dim)
    w_x    : (input_size, decoder_dim)    (pre-transposed vs. PyTorch Linear)
    b_x    : (decoder_dim,) or (1, decoder_dim)
    w_h    : (decoder_dim, decoder_dim)
    b_h    : (decoder_dim,) or (1, decoder_dim)
    returns s_t : (B, decoder_dim)
    """
    B, decoder_dim = h_last.shape
    input_size = x_t.shape[1]
    K = input_size + decoder_dim

    # ---- parameter folding: single GEMM operand + pre-summed bias --------
    # TODO(synk): in a real decoder these folds happen once at load time, not per call.
    w = jnp.concatenate([w_x, w_h], axis=0)                  # (K, N)
    b = (jnp.reshape(b_x, (1, decoder_dim))
         + jnp.reshape(b_h, (1, decoder_dim)))               # (1, N)
    xh = jnp.concatenate([x_t, h_last], axis=-1)             # (B, K)

    if matmul_dtype is not None:
        xh = xh.astype(matmul_dtype)
        w = w.astype(matmul_dtype)

    # ---- pad to sublane/lane-dense tile multiples -------------------------
    tm = min(tile_m, _round_up(B, 8))              # multiple of 8   (sublane)
    tn = min(tile_n, _round_up(decoder_dim, 128))  # multiple of 128 (lane)
    Bp = _round_up(B, tm)
    Np = _round_up(decoder_dim, tn)
    Kp = _round_up(K, 128)

    xh = jnp.pad(xh, ((0, Bp - B), (0, Kp - K)))
    w = jnp.pad(w, ((0, Kp - K), (0, Np - decoder_dim)))
    b = jnp.pad(b, ((0, 0), (0, Np - decoder_dim)))
    m = jnp.pad(m_t, ((0, Bp - B), (0, Np - decoder_dim)))

    # Grid: N-blocks outer, M-blocks inner -> weight block index constant
    # across the inner axis (Pallas skips the redundant weight re-DMA).
    grid = (Np // tn, Bp // tm)

    out = pl.pallas_call(
        _sentinel_kernel,
        out_shape=jax.ShapeDtypeStruct((Bp, Np), x_t.dtype),
        grid_spec=pltpu.PrefetchScalarGridSpec(
            num_scalar_prefetch=0,
            grid=grid,
            in_specs=[
                pl.BlockSpec((tm, Kp), lambda j, i: (i, 0)),   # xh tile
                pl.BlockSpec((Kp, tn), lambda j, i: (0, j)),   # fused weight tile
                pl.BlockSpec((1, tn), lambda j, i: (0, j)),    # fused bias tile
                pl.BlockSpec((tm, tn), lambda j, i: (i, j)),   # m_t tile
            ],
            out_specs=pl.BlockSpec((tm, tn), lambda j, i: (i, j)),
        ),
        compiler_params=pltpu.CompilerParams(
            dimension_semantics=("parallel", "parallel"),
        ),
    )(xh, w, b, m)

    return out[:B, :decoder_dim]


def _xavier_uniform(key, fan_in, fan_out, dtype=jnp.float32):
    # matches torch.nn.init.xavier_uniform_ bound
    limit = (6.0 / (fan_in + fan_out)) ** 0.5
    return jax.random.uniform(key, (fan_in, fan_out), dtype, -limit, limit)


if __name__ == "__main__":
    key = jax.random.PRNGKey(0)
    batch = 2
    embed_dim = 16
    input_size = 2 * embed_dim          # [ w_t ; v^g ]
    decoder_dim = 32

    k_x, k_h, k_m, k_wx, k_bx, k_wh, k_bh = jax.random.split(key, 7)

    x_t = jax.random.normal(k_x, (batch, input_size), jnp.float32)
    h_last = jax.random.normal(k_h, (batch, decoder_dim), jnp.float32)
    m_t = jax.random.normal(k_m, (batch, decoder_dim), jnp.float32)

    # Parameters: weights xavier_uniform as in init_weights(); biases use
    # PyTorch's default Linear bias init U(-1/sqrt(fan_in), +1/sqrt(fan_in)).
    w_x = _xavier_uniform(k_wx, input_size, decoder_dim)          # (in, out)
    w_h = _xavier_uniform(k_wh, decoder_dim, decoder_dim)
    bx_bound = 1.0 / (input_size ** 0.5)
    bh_bound = 1.0 / (decoder_dim ** 0.5)
    b_x = jax.random.uniform(k_bx, (decoder_dim,), jnp.float32, -bx_bound, bx_bound)
    b_h = jax.random.uniform(k_bh, (decoder_dim,), jnp.float32, -bh_bound, bh_bound)

    # Pure-JAX reference (dropout is an inference no-op).
    ref = jax.nn.sigmoid(x_t @ w_x + b_x + h_last @ w_h + b_h) * jnp.tanh(m_t)

    # --- f32 GEMM path -----------------------------------------------------
    s_t = sentinel_forward(x_t, h_last, m_t, w_x, b_x, w_h, b_h)
    s_t = jax.block_until_ready(s_t)
    assert s_t.shape == (batch, decoder_dim)
    assert jnp.allclose(s_t, ref, atol=1e-5, rtol=1e-5)

    # --- bf16 GEMM operands, f32 accumulate (v6e/v7x fast path) -------------
    s_bf16 = sentinel_forward(x_t, h_last, m_t, w_x, b_x, w_h, b_h,
                              matmul_dtype=jnp.bfloat16)
    s_bf16 = jax.block_until_ready(s_bf16)
    assert s_bf16.shape == (batch, decoder_dim)
    assert jnp.allclose(s_bf16, ref, atol=5e-2, rtol=5e-2)

    print("KERNEL_OK")
</pallas_src>

<mosaic_0001>
module attributes {stable_mosaic.version = 11 : i64} {
  func.func @_sentinel_kernel(%arg0: i32, %arg1: i32, %arg2: memref<8x128xf32, #tpu.memory_space<vmem>>, %arg3: memref<128x128xf32, #tpu.memory_space<vmem>>, %arg4: memref<1x128xf32, #tpu.memory_space<vmem>>, %arg5: memref<8x128xf32, #tpu.memory_space<vmem>>, %arg6: memref<8x128xf32, #tpu.memory_space<vmem>>) attributes {dimension_semantics = [#tpu.dimension_semantics<parallel>, #tpu.dimension_semantics<parallel>], iteration_bounds = array<i64: 1, 1>, scalar_prefetch = 0 : i64, scratch_operands = 0 : i64, tpu.core_type = #tpu.core_type<tc>, window_params = [{transform_indices = @transform_0, window_bounds = array<i64: 8, 128>}, {transform_indices = @transform_1, window_bounds = array<i64: 128, 128>}, {transform_indices = @transform_2, window_bounds = array<i64: 1, 128>}, {transform_indices = @transform_3, window_bounds = array<i64: 8, 128>}, {transform_indices = @transform_4, window_bounds = array<i64: 8, 128>}]} {
    %c0 = arith.constant 0 : index
    %c0_0 = arith.constant 0 : index
    %0 = vector.load %arg2[%c0, %c0_0] : memref<8x128xf32, #tpu.memory_space<vmem>>, vector<8x128xf32>
    %c0_1 = arith.constant 0 : index
    %c0_2 = arith.constant 0 : index
    %1 = vector.load %arg3[%c0_1, %c0_2] : memref<128x128xf32, #tpu.memory_space<vmem>>, vector<128x128xf32>
    %cst = arith.constant dense<0.000000e+00> : vector<8x128xf32>
    %2 = tpu.matmul %0, %1, %cst {dimension_numbers = #tpu.dot_dimension_numbers<[1], [0], [0], [1], [0, 0, 1, 1], [], []>} : vector<8x128xf32>, vector<128x128xf32>, vector<8x128xf32> -> vector<8x128xf32>
    %c0_3 = arith.constant 0 : index
    %c0_4 = arith.constant 0 : index
    %3 = vector.load %arg4[%c0_3, %c0_4] : memref<1x128xf32, #tpu.memory_space<vmem>>, vector<1x128xf32>
    %4 = vector.broadcast %3 : vector<1x128xf32> to vector<8x128xf32>
    %5 = arith.addf %2, %4 : vector<8x128xf32>
    %6 = arith.negf %5 : vector<8x128xf32>
    %7 = math.exp %6 : vector<8x128xf32>
    %cst_5 = arith.constant 1.000000e+00 : f32
    %8 = vector.broadcast %cst_5 : f32 to vector<8x128xf32>
    %9 = arith.addf %8, %7 : vector<8x128xf32>
    %10 = arith.divf %8, %9 : vector<8x128xf32>
    %c0_6 = arith.constant 0 : index
    %c0_7 = arith.constant 0 : index
    %11 = vector.load %arg5[%c0_6, %c0_7] : memref<8x128xf32, #tpu.memory_space<vmem>>, vector<8x128xf32>
    %12 = math.tanh %11 : vector<8x128xf32>
    %13 = arith.mulf %10, %12 : vector<8x128xf32>
    %c0_8 = arith.constant 0 : index
    %c0_9 = arith.constant 0 : index
    %14 = vector.load %arg6[%c0_8, %c0_9] : memref<8x128xf32, #tpu.memory_space<vmem>>, vector<8x128xf32>
    tpu.vector_store %arg6[%c0_8, %c0_9], %13 {strides = array<i32>} : memref<8x128xf32, #tpu.memory_space<vmem>>, vector<8x128xf32>,
    return
  }
  func.func @transform_0(%arg0: i32, %arg1: i32) -> (i32, i32) {
    %c0_i32 = arith.constant 0 : i32
    %c0_i32_0 = arith.constant 0 : i32
    return %arg1, %c0_i32 : i32, i32
  }
  func.func @transform_1(%arg0: i32, %arg1: i32) -> (i32, i32) {
    %c0_i32 = arith.constant 0 : i32
    %c0_i32_0 = arith.constant 0 : i32
    return %c0_i32, %arg0 : i32, i32
  }
  func.func @transform_2(%arg0: i32, %arg1: i32) -> (i32, i32) {
    %c0_i32 = arith.constant 0 : i32
    %c0_i32_0 = arith.constant 0 : i32
    return %c0_i32, %arg0 : i32, i32
  }
  func.func @transform_3(%arg0: i32, %arg1: i32) -> (i32, i32) {
    %c0_i32 = arith.constant 0 : i32
    return %arg1, %arg0 : i32, i32
  }
  func.func @transform_4(%arg0: i32, %arg1: i32) -> (i32, i32) {
    %c0_i32 = arith.constant 0 : i32
    return %arg1, %arg0 : i32, i32
  }
}

</mosaic_0001>

<llo_original>
// kernel: sentinel_forward.1
$region0: #{sentinel_forward.1}
  #allocation0 [shape = 'u32[]', space=smem, size = 0x4, offset = 0x4, fixed_abs, tag = 'smem constant byte address 0x4 - core index']
  #allocation1 [shape = 'u32[144,128]{1,0:T(1,128)}', space=vmem, size = 0x12000, scoped, tag = 'internal scratch']
  %s0 = inlined_call_operand.vmem [shape: f32[8,128], index: 0, kind: input, shape index: {}]
  %s1 = inlined_call_operand.vmem [shape: f32[128,128], index: 1, kind: input, shape index: {}]
  %s2 = inlined_call_operand.vmem [shape: f32[1,128], index: 2, kind: input, shape index: {}]
  %s3 = inlined_call_operand.vmem [shape: f32[8,128], index: 3, kind: input, shape index: {}]
  %s4 = inlined_call_operand.vmem [shape: f32[8,128], index: 4, kind: output, shape index: {}]
  %s5 = sld [smem:[#allocation0]]
  $region26: #{sentinel_forward.1} parent=0
    _
  %s7 = ssub.s32 1, %s5
  %s8 = scalar_select 0, %s7, %s5
  // Predicated region
  $region2: #{sentinel_forward.1} parent=0 // pred_check
    _
  $region3: #{sentinel_forward.1} parent=0 // pred_check_branch
    %10 = sbr.rel (0) target = $region5
  $region4: #{sentinel_forward.1} parent=0 // pred_region
    _
  $region5: #{sentinel_forward.1} parent=0 // pred_fallthru
    _
  // Predicated region
  $region6: #{sentinel_forward.1} parent=0 // pred_check
    _
  $region7: #{sentinel_forward.1} parent=0 // pred_check_branch
    %12 = sbr.rel (0) target = $region9
  $region8: #{sentinel_forward.1} parent=0 // pred_region
    _
  $region9: #{sentinel_forward.1} parent=0 // pred_fallthru
    _
  // Predicated region
  $region10: #{sentinel_forward.1} parent=0 // pred_check
    _
  $region11: #{sentinel_forward.1} parent=0 // pred_check_branch
    %14 = sbr.rel (0) target = $region13
  $region12: #{sentinel_forward.1} parent=0 // pred_region
    _
  $region13: #{sentinel_forward.1} parent=0 // pred_fallthru
    _
  // Predicated region
  $region14: #{sentinel_forward.1} parent=0 // pred_check
    _
  $region15: #{sentinel_forward.1} parent=0 // pred_check_branch
    %16 = sbr.rel (0) target = $region17
  $region16: #{sentinel_forward.1} parent=0 // pred_region
    _
  $region17: #{sentinel_forward.1} parent=0 // pred_fallthru
    _
  %v17 = vld [vmem:[%s0] sm:$0xff]
  %v18 = vld [vmem:[%s1] sm:$0xff]
  %v19 = vld [vmem:[%s1 + $0x8] sm:$0xff]
  %v20 = vld [vmem:[%s1 + $0x10] sm:$0xff]
  %v21 = vld [vmem:[%s1 + $0x18] sm:$0xff]
  %v22 = vld [vmem:[%s1 + $0x20] sm:$0xff]
  %v23 = vld [vmem:[%s1 + $0x28] sm:$0xff]
  %v24 = vld [vmem:[%s1 + $0x30] sm:$0xff]
  %v25 = vld [vmem:[%s1 + $0x38] sm:$0xff]
  %v26 = vld [vmem:[%s1 + $0x40] sm:$0xff]
  %v27 = vld [vmem:[%s1 + $0x48] sm:$0xff]
  %v28 = vld [vmem:[%s1 + $0x50] sm:$0xff]
  %v29 = vld [vmem:[%s1 + $0x58] sm:$0xff]
  %v30 = vld [vmem:[%s1 + $0x60] sm:$0xff]
  %v31 = vld [vmem:[%s1 + $0x68] sm:$0xff]
  %v32 = vld [vmem:[%s1 + $0x70] sm:$0xff]
  %v33 = vld [vmem:[%s1 + $0x78] sm:$0xff]
  %v34 = vld [vmem:[%s2] sm:$0x1]
  %v36 = vlaneseq
  %v37 = vshrl.u32 %v36, 7
  %v38 = vsub.s32 0, %v37
  %v39 = vrot.slane %v34, %v38
  %41 = vmatprep.subr.mxu0 0.0
  %42 = vmatpush1.msra.mxu0 %v18
  %43 = vmatprep.subr.mxu0 0.0
  %44 = vmatpush1.msra.mxu0 %v19
  %45 = vmatprep.subr.mxu0 0.0
  %46 = vmatpush1.msra.mxu0 %v20
  %47 = vmatprep.subr.mxu0 0.0
  %48 = vmatpush1.msra.mxu0 %v21
  %49 = vmatprep.subr.mxu0 0.0
  %50 = vmatpush1.msra.mxu0 %v22
  %51 = vmatprep.subr.mxu0 0.0
  %52 = vmatpush1.msra.mxu0 %v23
  %53 = vmatprep.subr.mxu0 0.0
  %54 = vmatpush1.msra.mxu0 %v24
  %55 = vmatprep.subr.mxu0 0.0
  %56 = vmatpush1.msra.mxu0 %v25
  %57 = vmatprep.subr.mxu0 0.0
  %58 = vmatpush1.msra.mxu0 %v26
  %59 = vmatprep.subr.mxu0 0.0
  %60 = vmatpush1.msra.mxu0 %v27
  %61 = vmatprep.subr.mxu0 0.0
  %62 = vmatpush1.msra.mxu0 %v28
  %63 = vmatprep.subr.mxu0 0.0
  %64 = vmatpush1.msra.mxu0 %v29
  %65 = vmatprep.subr.mxu0 0.0
  %66 = vmatpush1.msra.mxu0 %v30
  %67 = vmatprep.subr.mxu0 0.0
  %68 = vmatpush1.msra.mxu0 %v31
  %69 = vmatprep.subr.mxu0 0.0
  %70 = vmatpush1.msra.mxu0 %v32
  %71 = vmatprep.subr.mxu0 0.0
  %72 = vmatpush1.msra.mxu0 %v33
  %73 = vmatprep.subr.mxu0 0.0
  %74 = vmatpush1.msra.mxu0 0.0
  %75 = vmatprep.subr.mxu0 0.0
  %76 = vmatpush1.msra.mxu0 0.0
  %77 = vmatprep.subr.mxu0 0.0
  %78 = vmatpush1.msra.mxu0 0.0
  %79 = vmatprep.subr.mxu0 0.0
  %80 = vmatpush1.msra.mxu0 0.0
  %81 = vmatprep.subr.mxu0 0.0
  %82 = vmatpush1.msra.mxu0 0.0
  %83 = vmatprep.subr.mxu0 0.0
  %84 = vmatpush1.msra.mxu0 0.0
  %85 = vmatprep.subr.mxu0 0.0
  %86 = vmatpush1.msra.mxu0 0.0
  %87 = vmatprep.subr.mxu0 0.0
  %88 = vmatpush1.msra.mxu0 0.0
  %89 = vmatprep.subr.mxu0 0.0
  %90 = vmatpush1.msra.mxu0 0.0
  %91 = vmatprep.subr.mxu0 0.0
  %92 = vmatpush1.msra.mxu0 0.0
  %93 = vmatprep.subr.mxu0 0.0
  %94 = vmatpush1.msra.mxu0 0.0
  %95 = vmatprep.subr.mxu0 0.0
  %96 = vmatpush1.msra.mxu0 0.0
  %97 = vmatprep.subr.mxu0 0.0
  %98 = vmatpush1.msra.mxu0 0.0
  %99 = vmatprep.subr.mxu0 0.0
  %100 = vmatpush1.msra.mxu0 0.0
  %101 = vmatprep.subr.mxu0 0.0
  %102 = vmatpush1.msra.mxu0 0.0
  %103 = vmatprep.subr.mxu0 0.0
  %104 = vmatpush1.msra.mxu0 0.0
  %105 = vmatprep.mubr.f32.mxu0 0.0
  %106 = vmatmul.mubr.f32.gmra.mrb[0].mxu0 %v17
  %v107 = vpop.f32.mrb[0].mxu0
  %v108 = vadd.f32 %v39, %v107
  %v109 = vpop.f32.mrb[0].mxu0
  %110 = vdwg.mxu0
  %v111 = vxor.u32 %v108, 2147483648
  %v112 = vmul.f32 %v111, 1.442695
  %v113 = vpow.pop %v112
  %v114 = vadd.f32 %v113, 1.0
  %v115 = vrcp.pop %v114
  %v116 = vmul.f32 1.0, %v115
  %v117 = vld [vmem:[%s3] sm:$0xff]
  %v118 = vtanh.pop %v117
  %v119 = vmul.f32 %v116, %v118
  %120 = vst [vmem:[%s4] sm:$0xff] %v119
  // Predicated region
  $region18: #{sentinel_forward.1} parent=0 // pred_check
    _
  $region19: #{sentinel_forward.1} parent=0 // pred_check_branch
    %122 = sbr.rel (0) target = $region21
  $region20: #{sentinel_forward.1} parent=0 // pred_region
    _
  $region21: #{sentinel_forward.1} parent=0 // pred_fallthru
    _
  // Predicated region
  $region22: #{sentinel_forward.1} parent=0 // pred_check
    _
  $region23: #{sentinel_forward.1} parent=0 // pred_check_branch
    %124 = sbr.rel (0) target = $region25
  $region24: #{sentinel_forward.1} parent=0 // pred_region
    _
  $region25: #{sentinel_forward.1} parent=0 // pred_fallthru
    _

</llo_original>
